<compile_context>
chip_gen: v7x
topology: tpu7x:2x2x1
jax: 0.10.0
libtpu: 0.0.40
codegen_flags: <defaults>
</compile_context>

<pallas_src>
import functools

import jax
import jax.numpy as jnp
from jax import lax
from jax.experimental import pallas as pl
from jax.experimental.pallas import tpu as pltpu

_EPS = 1e-6          # F.pairwise_distance default eps (added to the difference)
_LANES = 128
_SUBLANES = 8
_BLOCK_ROWS = 512    # (512,128) f32 block = 256 KiB per pipeline buffer
_NCORES = 2          # leading "parallel" grid axis (megacore split on v7x)
_PAD = 1e7           # pad coords land far from pos -> relu(dmin - dist) == 0


def _round_up(x, m):
    return (x + m - 1) // m * m


def _my_loss2_kernel(consts_ref, pred_ref, sum_ref, cnt_ref):
    # consts_ref: SMEM (3,) f32 = [cx, cy, dmin], cx = pos0*6 - eps, cy = pos1*0.6 - eps
    # pred_ref:   VMEM (TR, 128) f32, flattened interleaved [x0,y0,x1,y1,...]
    # sum_ref:    VMEM (8, 128) f32  resident partial-sum accumulator (per core)
    # cnt_ref:    VMEM (8, 128) f32  resident nonzero-count accumulator (per core)
    @pl.when(pl.program_id(1) == 0)
    def _init():
        sum_ref[...] = jnp.zeros_like(sum_ref)
        cnt_ref[...] = jnp.zeros_like(cnt_ref)

    tr = pred_ref.shape[0]
    v = pred_ref[...]                                        # (TR, 128)

    lane = lax.broadcasted_iota(jnp.int32, (tr, _LANES), 1)
    even = (lane & 1) == 0                                   # x coords on even lanes

    cx = consts_ref[0]
    cy = consts_ref[1]
    dmin = consts_ref[2]

    scale = jnp.where(even, 6.0, 0.6)                        # 10*0.6 / 1*0.6 per lane
    center = jnp.where(even, cx, cy)                         # scale & eps pre-folded
    diff = v * scale - center                                # scaled diff (+ eps)
    d2 = diff * diff

    # Bring lane i+1 next to lane i (XLU rotate, shift 127 == -1 mod 128), so even
    # lanes hold dx^2 + dy^2 of one sample.  Odd lanes hold garbage -> masked.
    d2_next = pltpu.roll(d2, _LANES - 1, 1)
    pair = d2 + d2_next

    temp = jnp.sqrt(pair)                                    # pairwise L2 distance
    n = jnp.maximum(dmin - temp, 0.0)                        # ReLU(dmin - temp)
    n = jnp.where(even, n, 0.0)                              # keep one value per sample
    nz = (n > 0.0).astype(jnp.float32)

    # Reduce (TR,128) -> one vreg (8,128): vreg-aligned slices, pure VPU adds.
    n_slab = n.reshape(tr // _SUBLANES, _SUBLANES, _LANES).sum(axis=0)
    nz_slab = nz.reshape(tr // _SUBLANES, _SUBLANES, _LANES).sum(axis=0)

    sum_ref[...] += n_slab
    cnt_ref[...] += nz_slab


@functools.partial(jax.jit, static_argnames=("block_rows",))
def my_loss2(pred, pos, dmin, *, block_rows=_BLOCK_ROWS):
    """pred: (N, 2) f32, pos: 2-element f32, dmin: scalar f32 -> scalar f32 loss."""
    pred = jnp.asarray(pred, jnp.float32)
    pos = jnp.asarray(pos, jnp.float32).reshape(2)
    dmin = jnp.asarray(dmin, jnp.float32).reshape(())

    n_samples = pred.shape[0]
    flat = pred.reshape(-1)                                  # interleaved, free reshape

    block_rows = _round_up(int(block_rows), _SUBLANES)
    rows_needed = max(_SUBLANES,
                      _round_up(pl.cdiv(2 * n_samples, _LANES), _SUBLANES))
    tr = min(block_rows, rows_needed)
    rows_padded = _round_up(rows_needed, _NCORES * tr)
    nb = rows_padded // (_NCORES * tr)                       # blocks per core

    pad = rows_padded * _LANES - flat.shape[0]
    flat = jnp.pad(flat, (0, pad), constant_values=_PAD)
    pred2d = flat.reshape(rows_padded, _LANES)

    # Fold scale + eps into per-coordinate centers (SMEM scalars).
    consts = jnp.stack([pos[0] * 6.0 - _EPS, pos[1] * 0.6 - _EPS, dmin])

    sums, cnts = pl.pallas_call(
        _my_loss2_kernel,
        out_shape=(
            jax.ShapeDtypeStruct((_NCORES * _SUBLANES, _LANES), jnp.float32),
            jax.ShapeDtypeStruct((_NCORES * _SUBLANES, _LANES), jnp.float32),
        ),
        grid=(_NCORES, nb),
        in_specs=[
            pl.BlockSpec(memory_space=pltpu.SMEM),                   # consts (3,)
            pl.BlockSpec((tr, _LANES), lambda c, b: (c * nb + b, 0)),  # pred slab
        ],
        out_specs=(
            pl.BlockSpec((_SUBLANES, _LANES), lambda c, b: (c, 0)),
            pl.BlockSpec((_SUBLANES, _LANES), lambda c, b: (c, 0)),
        ),
        compiler_params=pltpu.CompilerParams(
            dimension_semantics=("parallel", "arbitrary")),
    )(consts, pred2d)

    # Single tiny cross-lane reduction + divide (2 x 8 KiB), outside the hot loop.
    return jnp.sum(sums) / (jnp.sum(cnts) + 0.01)


def _reference(pred, pos, dmin):
    """Pure-JAX reference mirroring the PyTorch forward."""
    pred = jnp.asarray(pred, jnp.float32)
    pos = jnp.asarray(pos, jnp.float32).reshape(1, 2)
    pos = jnp.tile(pos, (pred.shape[0], 1))
    scale = jnp.array([[10.0 * 0.6, 1.0 * 0.6]], jnp.float32)
    diff = pred * scale - pos * scale + _EPS
    temp = jnp.sqrt(jnp.sum(diff * diff, axis=1))
    n = jnp.maximum(jnp.asarray(dmin, jnp.float32) - temp, 0.0)
    return jnp.sum(n) / (jnp.sum(n != 0).astype(jnp.float32) + 0.01)


if __name__ == "__main__":
    key = jax.random.PRNGKey(0)
    k1, k2 = jax.random.split(key)

    # Small shape consistent with the module: batch of 8 (x, y) predictions.
    N = 8
    pred = jax.random.normal(k1, (N, 2), dtype=jnp.float32)
    pos = jax.random.normal(k2, (2,), dtype=jnp.float32)
    dmin = jnp.float32(2.0)

    loss = my_loss2(pred, pos, dmin)
    jax.block_until_ready(loss)
    ref = _reference(pred, pos, dmin)
    assert jnp.allclose(loss, ref, rtol=1e-4, atol=1e-4), (loss, ref)

    # Exercise the multi-step pipelined accumulation + padding path with tiny blocks.
    N2 = 3000
    pred2 = jax.random.normal(k1, (N2, 2), dtype=jnp.float32) * 0.5
    dmin2 = jnp.float32(4.0)
    loss2 = my_loss2(pred2, pos, dmin2, block_rows=8)
    jax.block_until_ready(loss2)
    ref2 = _reference(pred2, pos, dmin2)
    assert jnp.allclose(loss2, ref2, rtol=1e-4, atol=1e-4), (loss2, ref2)

    print("KERNEL_OK")
</pallas_src>

<mosaic_0001>
module attributes {stable_mosaic.version = 11 : i64} {
  func.func @_my_loss2_kernel(%arg0: i32, %arg1: i32, %arg2: memref<3xf32, #tpu.memory_space<smem>>, %arg3: memref<8x128xf32, #tpu.memory_space<vmem>>, %arg4: memref<8x128xf32, #tpu.memory_space<vmem>>, %arg5: memref<8x128xf32, #tpu.memory_space<vmem>>) attributes {dimension_semantics = [#tpu.dimension_semantics<parallel>, #tpu.dimension_semantics<arbitrary>], iteration_bounds = array<i64: 2, 1>, scalar_prefetch = 0 : i64, scratch_operands = 0 : i64, tpu.core_type = #tpu.core_type<tc>, window_params = [{transform_indices = @transform_0, window_bounds = array<i64: 3>}, {transform_indices = @transform_1, window_bounds = array<i64: 8, 128>}, {transform_indices = @transform_2, window_bounds = array<i64: 8, 128>}, {transform_indices = @transform_3, window_bounds = array<i64: 8, 128>}]} {
    %c0_i32 = arith.constant 0 : i32
    %0 = arith.cmpi eq, %arg1, %c0_i32 : i32
    %1 = arith.extui %0 : i1 to i32
    %c0_i32_0 = arith.constant 0 : i32
    %2 = arith.cmpi ne, %1, %c0_i32_0 : i32
    scf.if %2 {
      %cst_18 = arith.constant 0.000000e+00 : f32
      %44 = vector.broadcast %cst_18 : f32 to vector<8x128xf32>
      %c0_19 = arith.constant 0 : index
      %c0_20 = arith.constant 0 : index
      %45 = vector.load %arg4[%c0_19, %c0_20] : memref<8x128xf32, #tpu.memory_space<vmem>>, vector<8x128xf32>
      tpu.vector_store %arg4[%c0_19, %c0_20], %44 {strides = array<i32>} : memref<8x128xf32, #tpu.memory_space<vmem>>, vector<8x128xf32>,
      %cst_21 = arith.constant 0.000000e+00 : f32
      %46 = vector.broadcast %cst_21 : f32 to vector<8x128xf32>
      %c0_22 = arith.constant 0 : index
      %c0_23 = arith.constant 0 : index
      %47 = vector.load %arg5[%c0_22, %c0_23] : memref<8x128xf32, #tpu.memory_space<vmem>>, vector<8x128xf32>
      tpu.vector_store %arg5[%c0_22, %c0_23], %46 {strides = array<i32>} : memref<8x128xf32, #tpu.memory_space<vmem>>, vector<8x128xf32>,
    } else {
    }
    %c0 = arith.constant 0 : index
    %c0_1 = arith.constant 0 : index
    %3 = vector.load %arg3[%c0, %c0_1] : memref<8x128xf32, #tpu.memory_space<vmem>>, vector<8x128xf32>
    %4 = tpu.iota {dimensions = array<i32: 1>} : vector<8x128xi32>
    %c1_i32 = arith.constant 1 : i32
    %5 = vector.broadcast %c1_i32 : i32 to vector<8x128xi32>
    %6 = arith.andi %4, %5 : vector<8x128xi32>
    %c0_i32_2 = arith.constant 0 : i32
    %7 = vector.broadcast %c0_i32_2 : i32 to vector<8x128xi32>
    %8 = arith.cmpi eq, %6, %7 : vector<8x128xi32>
    %c0_3 = arith.constant 0 : index
    %9 = memref.load %arg2[%c0_3] : memref<3xf32, #tpu.memory_space<smem>>
    %c1 = arith.constant 1 : index
    %10 = memref.load %arg2[%c1] : memref<3xf32, #tpu.memory_space<smem>>
    %c2 = arith.constant 2 : index
    %11 = memref.load %arg2[%c2] : memref<3xf32, #tpu.memory_space<smem>>
    %cst = arith.constant 6.000000e+00 : f32
    %cst_4 = arith.constant 6.000000e-01 : f32
    %12 = vector.broadcast %cst : f32 to vector<8x128xf32>
    %13 = vector.broadcast %cst_4 : f32 to vector<8x128xf32>
    %14 = arith.select %8, %12, %13 : vector<8x128xi1>, vector<8x128xf32>
    %15 = vector.broadcast %9 : f32 to vector<8x128xf32>
    %16 = vector.broadcast %10 : f32 to vector<8x128xf32>
    %17 = arith.select %8, %15, %16 : vector<8x128xi1>, vector<8x128xf32>
    %18 = arith.mulf %3, %14 : vector<8x128xf32>
    %19 = arith.subf %18, %17 : vector<8x128xf32>
    %20 = arith.mulf %19, %19 : vector<8x128xf32>
    %c127_i32 = arith.constant 127 : i32
    %21 = tpu.dynamic_rotate %20 by %c127_i32 dim 1 : vector<8x128xf32>, i32 -> vector<8x128xf32>
    %22 = arith.addf %20, %21 : vector<8x128xf32>
    %23 = math.sqrt %22 : vector<8x128xf32>
    %24 = vector.broadcast %11 : f32 to vector<8x128xf32>
    %25 = arith.subf %24, %23 : vector<8x128xf32>
    %cst_5 = arith.constant 0.000000e+00 : f32
    %26 = vector.broadcast %cst_5 : f32 to vector<8x128xf32>
    %27 = arith.maximumf %25, %26 : vector<8x128xf32>
    %cst_6 = arith.constant 0.000000e+00 : f32
    %28 = vector.broadcast %cst_6 : f32 to vector<8x128xf32>
    %29 = arith.select %8, %27, %28 : vector<8x128xi1>, vector<8x128xf32>
    %cst_7 = arith.constant 0.000000e+00 : f32
    %30 = vector.broadcast %cst_7 : f32 to vector<8x128xf32>
    %31 = arith.cmpf ogt, %29, %30 : vector<8x128xf32>
    %32 = arith.extui %31 : vector<8x128xi1> to vector<8x128xi32>
    %33 = arith.sitofp %32 : vector<8x128xi32> to vector<8x128xf32>
    %34 = vector.shape_cast %29 : vector<8x128xf32> to vector<1x8x128xf32>
    %cst_8 = arith.constant dense<0.000000e+00> : vector<8x128xf32>
    %35 = vector.multi_reduction <add>, %34, %cst_8 [0] : vector<1x8x128xf32> to vector<8x128xf32>
    %36 = vector.shape_cast %33 : vector<8x128xf32> to vector<1x8x128xf32>
    %cst_9 = arith.constant dense<0.000000e+00> : vector<8x128xf32>
    %37 = vector.multi_reduction <add>, %36, %cst_9 [0] : vector<1x8x128xf32> to vector<8x128xf32>
    %c0_10 = arith.constant 0 : index
    %c0_11 = arith.constant 0 : index
    %38 = vector.load %arg4[%c0_10, %c0_11] : memref<8x128xf32, #tpu.memory_space<vmem>>, vector<8x128xf32>
    %39 = arith.addf %38, %35 : vector<8x128xf32>
    %c0_12 = arith.constant 0 : index
    %c0_13 = arith.constant 0 : index
    %40 = vector.load %arg4[%c0_12, %c0_13] : memref<8x128xf32, #tpu.memory_space<vmem>>, vector<8x128xf32>
    tpu.vector_store %arg4[%c0_12, %c0_13], %39 {strides = array<i32>} : memref<8x128xf32, #tpu.memory_space<vmem>>, vector<8x128xf32>,
    %c0_14 = arith.constant 0 : index
    %c0_15 = arith.constant 0 : index
    %41 = vector.load %arg5[%c0_14, %c0_15] : memref<8x128xf32, #tpu.memory_space<vmem>>, vector<8x128xf32>
    %42 = arith.addf %41, %37 : vector<8x128xf32>
    %c0_16 = arith.constant 0 : index
    %c0_17 = arith.constant 0 : index
    %43 = vector.load %arg5[%c0_16, %c0_17] : memref<8x128xf32, #tpu.memory_space<vmem>>, vector<8x128xf32>
    tpu.vector_store %arg5[%c0_16, %c0_17], %42 {strides = array<i32>} : memref<8x128xf32, #tpu.memory_space<vmem>>, vector<8x128xf32>,
    return
  }
  func.func @transform_0(%arg0: i32, %arg1: i32) -> i32 {
    %c0_i32 = arith.constant 0 : i32
    %c0_i32_0 = arith.constant 0 : i32
    return %c0_i32 : i32
  }
  func.func @transform_1(%arg0: i32, %arg1: i32) -> (i32, i32) {
    %c1_i32 = arith.constant 1 : i32
    %0 = arith.muli %arg0, %c1_i32 : i32
    %1 = arith.addi %0, %arg1 : i32
    %c0_i32 = arith.constant 0 : i32
    %c0_i32_0 = arith.constant 0 : i32
    return %1, %c0_i32 : i32, i32
  }
  func.func @transform_2(%arg0: i32, %arg1: i32) -> (i32, i32) {
    %c0_i32 = arith.constant 0 : i32
    %c0_i32_0 = arith.constant 0 : i32
    return %arg0, %c0_i32 : i32, i32
  }
  func.func @transform_3(%arg0: i32, %arg1: i32) -> (i32, i32) {
    %c0_i32 = arith.constant 0 : i32
    %c0_i32_0 = arith.constant 0 : i32
    return %arg0, %c0_i32 : i32, i32
  }
}

</mosaic_0001>

<llo_original>
// kernel: my_loss2.1
$region0: #{my_loss2.1}
  #allocation0 [shape = 'u32[]', space=smem, size = 0x4, offset = 0x4, fixed_abs, tag = 'smem constant byte address 0x4 - core index']
  #allocation1 [shape = 'u32[144,128]{1,0:T(1,128)}', space=vmem, size = 0x12000, scoped, tag = 'internal scratch']
  %s0 = inlined_call_operand.vmem [shape: f32[3], index: 0, kind: input, shape index: {}]
  %s1 = inlined_call_operand.vmem [shape: f32[16,128], index: 1, kind: input, shape index: {}]
  %s2 = inlined_call_operand.vmem [shape: f32[16,128], index: 2, kind: output, shape index: {0}]
  %s3 = inlined_call_operand.vmem [shape: f32[16,128], index: 3, kind: output, shape index: {1}]
  %4 = xla_tuple %s2, %s3
  %s5 = sld [smem:[#allocation0]]
  $region57: #{my_loss2.1} parent=0
    _
  %s7 = ssub.s32 1, %s5
  %s8 = scalar_select 0, %s7, %s5
  $region1: #{my_loss2.1} parent=0
    #allocation2 [shape = 'u8[512]{0}', space=smem, size = 0x200, scoped, tag = 'input window, operand 0, single buffered']
    #allocation3 [shape = 's32[2]{0}', space=sflag, size = 0x8, scoped, tag = 'scoped memory for my_loss2.1']
    %9 = vsyncpa [#allocation3], 0
    loop: start=0, step=1, limit=4
    $region2: #{my_loss2.1} parent=1 // loop_pre_header
      _
    $region3: #{my_loss2.1} parent=1 // loop_header
      %s11 = sphi 0, %s15
      %p12 = scmp.ge.s32.totalorder %s11, 4
      %s18 = sphi 0, %s30
      %s19 = sphi 0, %s26
      %s20 = sphi 0, %s18
      %s21 = sphi 0, %s19
      %s22 = sphi 0, %s20
      %s23 = sphi 0, %s21
      %s31 = sphi 0, %s31
      %s33 = sphi 0, %s31
      %s34 = sphi 0, %s33
      %s48 = sphi 0, %s34
      %s56 = sphi 0, %s58
      %s59 = sphi 0, %s56
      %s60 = sphi 0, %s59
      %s76 = sphi 0, %s60
      %s82 = sphi 0, %s84
      %s85 = sphi 0, %s82
      %s86 = sphi 0, %s85
      %s102 = sphi 0, %s86
      %s108 = sphi 0, %s110
      %s111 = sphi 0, %s108
      %s112 = sphi 0, %s111
      %s128 = sphi 0, %s112
    $region4: #{my_loss2.1} parent=1 // loop_header_branch
      %14 = sbr.rel (%p12) target = $region8
    $region5: #{my_loss2.1} parent=1 // loop_body
      %s16 = ssub.s32 %s11, 1
      %s17 = ssub.s32 %s11, 2
      %s24 = sadd.s32 1, %s19
      %p25 = scmp.ge.s32.totalorder %s24, 1
      %s26 = scalar_select %p25, 0, %s24
      %s27 = sadd.s32 1, %s18
      %s28 = scalar_select %p25, %s27, %s18
      %p29 = scmp.ge.s32.totalorder %s28, 2
      %s30 = scalar_select %p29, 0, %s28
      %s32 = sadd.s32 %s31, 1
      %p35 = scmp.eq.s32.totalorder %s11, 1
      %p36 = scmp.ne.s32.totalorder %s31, %s33
      %p37 = scmp.eq.s32.totalorder %s11, 0
      %p38 = por %p36, %p37
      %p39 = scmp.ne.s32.totalorder %s31, %s33
      %p40 = scmp.eq.s32.totalorder %s16, 1
      %p41 = por %p39, %p40
      %p42 = scmp.ne.s32.totalorder %s33, %s34
      %p43 = scmp.eq.s32.totalorder %s16, 0
      %p44 = por %p42, %p43
      %p45 = scmp.ne.s32.totalorder %s33, %s34
      %p46 = scmp.eq.s32.totalorder %s17, 1
      %p47 = por %p45, %p46
      %p49 = scmp.ne.s32.totalorder %s34, %s48
      %p50 = scmp.eq.s32.totalorder %s17, 0
      %p51 = por %p49, %p50
      %s52 = sadd.s32 %s18, %s19
      %s53 = sadd.s32 %s30, %s26
      %s54 = ssub.s32 %s52, %s53
      %p55 = scmp.eq.s32.totalorder %s54, 0
      %s57 = sadd.s32 %s56, 1
      %s58 = scalar_select %p55, %s56, %s57
      %p61 = pneg %p55
      %p62 = scmp.eq.s32.totalorder %s11, 1
      %p63 = por %p61, %p62
      %p64 = scmp.ne.s32.totalorder %s56, %s59
      %p65 = scmp.eq.s32.totalorder %s11, 0
      %p66 = por %p64, %p65
      %p67 = scmp.ne.s32.totalorder %s56, %s59
      %p68 = scmp.eq.s32.totalorder %s16, 1
      %p69 = por %p67, %p68
      %p70 = scmp.ne.s32.totalorder %s59, %s60
      %p71 = scmp.eq.s32.totalorder %s16, 0
      %p72 = por %p70, %p71
      %p73 = scmp.ne.s32.totalorder %s59, %s60
      %p74 = scmp.eq.s32.totalorder %s17, 1
      %p75 = por %p73, %p74
      %p77 = scmp.ne.s32.totalorder %s60, %s76
      %p78 = scmp.eq.s32.totalorder %s17, 0
      %p79 = por %p77, %p78
      %s80 = ssub.s32 %s18, %s30
      %p81 = scmp.eq.s32.totalorder %s80, 0
      %s83 = sadd.s32 %s82, 1
      %s84 = scalar_select %p81, %s82, %s83
      %p87 = pneg %p81
      %p88 = scmp.eq.s32.totalorder %s11, 1
      %p89 = por %p87, %p88
      %p90 = scmp.ne.s32.totalorder %s82, %s85
      %p91 = scmp.eq.s32.totalorder %s11, 0
      %p92 = por %p90, %p91
      %p93 = scmp.ne.s32.totalorder %s82, %s85
      %p94 = scmp.eq.s32.totalorder %s16, 1
      %p95 = por %p93, %p94
      %p96 = scmp.ne.s32.totalorder %s85, %s86
      %p97 = scmp.eq.s32.totalorder %s16, 0
      %p98 = por %p96, %p97
      %p99 = scmp.ne.s32.totalorder %s85, %s86
      %p100 = scmp.eq.s32.totalorder %s17, 1
      %p101 = por %p99, %p100
      %p103 = scmp.ne.s32.totalorder %s86, %s102
      %p104 = scmp.eq.s32.totalorder %s17, 0
      %p105 = por %p103, %p104
      %s106 = ssub.s32 %s18, %s30
      %p107 = scmp.eq.s32.totalorder %s106, 0
      %s109 = sadd.s32 %s108, 1
      %s110 = scalar_select %p107, %s108, %s109
      %p113 = pneg %p107
      %p114 = scmp.eq.s32.totalorder %s11, 1
      %p115 = por %p113, %p114
      %p116 = scmp.ne.s32.totalorder %s108, %s111
      %p117 = scmp.eq.s32.totalorder %s11, 0
      %p118 = por %p116, %p117
      %p119 = scmp.ne.s32.totalorder %s108, %s111
      %p120 = scmp.eq.s32.totalorder %s16, 1
      %p121 = por %p119, %p120
      %p122 = scmp.ne.s32.totalorder %s111, %s112
      %p123 = scmp.eq.s32.totalorder %s16, 0
      %p124 = por %p122, %p123
      %p125 = scmp.ne.s32.totalorder %s111, %s112
      %p126 = scmp.eq.s32.totalorder %s17, 1
      %p127 = por %p125, %p126
      %p129 = scmp.ne.s32.totalorder %s112, %s128
      %p130 = scmp.eq.s32.totalorder %s17, 0
      %p131 = por %p129, %p130
      %p132 = scmp.le.s32.totalorder 1, %s11
      %p133 = scmp.lt.s32.totalorder %s11, 3
      %p134 = pnand %p132, %p133
      %p135 = pneg %p134
      // Predicated region
      $region9: #{my_loss2.1} parent=5 // pred_check
        _
      $region10: #{my_loss2.1} parent=5 // pred_check_branch
        %137 = sbr.rel (%p134) target = $region12
      $region11: #{my_loss2.1} parent=5 // pred_region
        %s138 = ssub.s32 %s11, 1
        // Predicated region
        $region13: #{my_loss2.1} parent=11 // pred_check
          %p139 = pneg %p44
        $region14: #{my_loss2.1} parent=11 // pred_check_branch
          %141 = sbr.rel (%p139) target = $region16
        $region15: #{my_loss2.1} parent=11 // pred_region
          %s143 = ssub.s32 16, 16
          %144 = vsyncadd [#allocation3], %s143
          %s146 = sshll.u32 %s0, 4
          %s147 = int_to_ptr.vmem [resolvable:$true] %s146
          %149 = dma.vmem_to_smem %s147, 16, [#allocation2], [#allocation3]
        $region16: #{my_loss2.1} parent=11 // pred_fallthru
          _
      $region12: #{my_loss2.1} parent=5 // pred_fallthru
        _
      %p150 = scmp.lt.s32.totalorder %s11, 2
      // Predicated region
      $region17: #{my_loss2.1} parent=5 // pred_check
        %p151 = pneg %p150
      $region18: #{my_loss2.1} parent=5 // pred_check_branch
        %153 = sbr.rel (%p151) target = $region20
      $region19: #{my_loss2.1} parent=5 // pred_region
        // Predicated region
        $region21: #{my_loss2.1} parent=19 // pred_check
          %p154 = pneg %p66
        $region22: #{my_loss2.1} parent=19 // pred_check_branch
          %156 = sbr.rel (%p154) target = $region24
        $region23: #{my_loss2.1} parent=19 // pred_region
          %s157 = sadd.s32 %s18, %s19
          %p158 = scmp.lt.s32.totalorder %s157, 1
          %s159 = scalar_select %p158, %s157, 1
          %s160 = smul.addr %s159, 8
          %s161 = scalar_lea.vmem %s1, %s160
          %s162 = sadd.s32 %s18, %s19
        $region24: #{my_loss2.1} parent=19 // pred_fallthru
          _
      $region20: #{my_loss2.1} parent=5 // pred_fallthru
        _
      %p163 = scmp.le.s32.totalorder 1, %s11
      %p164 = scmp.lt.s32.totalorder %s11, 3
      %p165 = pnand %p163, %p164
      %p166 = pneg %p165
      // Predicated region
      $region25: #{my_loss2.1} parent=5 // pred_check
        _
      $region26: #{my_loss2.1} parent=5 // pred_check_branch
        %168 = sbr.rel (%p165) target = $region28
      $region27: #{my_loss2.1} parent=5 // pred_region
        %s169 = ssub.s32 %s11, 1
        // Predicated region
        $region29: #{my_loss2.1} parent=27 // pred_check
          %p170 = pneg %p44
        $region30: #{my_loss2.1} parent=27 // pred_check_branch
          %172 = sbr.rel (%p170) target = $region32
        $region31: #{my_loss2.1} parent=27 // pred_region
          %173 = dma.done [#allocation3], 16
        $region32: #{my_loss2.1} parent=27 // pred_fallthru
          _
        %174 = sfence
        %p175 = pneg %p44
        %p176 = pneg %p41
        %s177 = sadd.s32 %s20, %s21
        %p178 = scmp.lt.s32.totalorder %s177, 1
        %s179 = scalar_select %p178, %s177, 1
        %s180 = smul.addr %s179, 8
        %s181 = scalar_lea.vmem %s1, %s180
        %p182 = pneg %p72
        %p183 = pneg %p69
        %p184 = pneg %p98
        %p185 = pneg %p95
        %p186 = scmp.lt.s32.totalorder %s20, 1
        %s187 = scalar_select %p186, %s20, 1
        %s188 = smul.addr %s187, 8
        %s189 = scalar_lea.vmem %s2, %s188
        %p190 = pneg %p124
        %p191 = pneg %p121
        %p192 = scmp.lt.s32.totalorder %s20, 1
        %s193 = scalar_select %p192, %s20, 1
        %s194 = smul.addr %s193, 8
        %s195 = scalar_lea.vmem %s3, %s194
        %s196 = sadd.s32 %s20, %s21
        %p197 = scmp.lt.s32.totalorder %s196, 1
        %s198 = scalar_select %p197, %s196, 1
        %s199 = smul.addr %s198, 8
        %s200 = scalar_lea.vmem %s1, %s199
        %s201 = sadd.s32 %s20, %s21
        %p202 = scmp.lt.s32.totalorder %s20, 1
        %s203 = scalar_select %p202, %s20, 1
        %s204 = smul.addr %s203, 8
        %s205 = scalar_lea.vmem %s2, %s204
        %p206 = scmp.lt.s32.totalorder %s20, 1
        %s207 = scalar_select %p206, %s20, 1
        %s208 = smul.addr %s207, 8
        %s209 = scalar_lea.vmem %s3, %s208
        %p210 = scmp.eq.s32.totalorder %s21, 0
        // Predicated region
        $region33: #{my_loss2.1} parent=27 // pred_check
          %p211 = pneg %p210
        $region34: #{my_loss2.1} parent=27 // pred_check_branch
          %213 = sbr.rel (%p211) target = $region36
        $region35: #{my_loss2.1} parent=27 // pred_region
          %214 = vst [vmem:[%s205] sm:$0xff] 0.0
          %215 = vst [vmem:[%s209] sm:$0xff] 0.0
        $region36: #{my_loss2.1} parent=27 // pred_fallthru
          _
        %v216 = vld [vmem:[%s200] sm:$0xff]
        %v217 = vlaneseq
        %v218 = vand.u32 %v217, 127
        %v219 = vand.u32 %v218, 1
        %vm220 = vcmp.eq.s32.totalorder %v219, 0
        %s221 = sld [smem:[#allocation2]]
        %s222 = sld [smem:[#allocation2 + $0x1]]
        %s223 = sld [smem:[#allocation2 + $0x2]]
        %v224 = vsel %vm220, 6.0, 0.6
        %v225 = vstv %s221
        %v226 = vstv %s222
        %v227 = vsel %vm220, %v225, %v226
        %v228 = vmul.f32 %v216, %v224
        %v229 = vsub.f32 %v228, %v227
        %v230 = vmul.f32 %v229, %v229
        %231 = vrot.lane.b32.xlu0 %v230, 127
        %v232 = vpop.permute.xlu0 %231
        %v233 = vadd.f32 %v230, %v232
        %v234 = vrsqrt.pop %v233
        %v235 = vmul.f32 %v233, %v234
        %vm236 = vcmp.eq.f32.partialorder %v233, inf
        %v237 = vsel %vm236, %v233, %v235
        %vm238 = vcmp.eq.f32.partialorder %v233, 0.0
        %v239 = vand.u32 %v233, 2147483648
        %v240 = vsel %vm238, %v239, %v237
        %v241 = vstv %s223
        %v242 = vsub.f32 %v241, %v240
        %v243 = vmax.f32 %v242, 0.0
        %v244 = vsel %vm220, %v243, 0.0
        %vm245 = vcmp.gt.f32.partialorder %v244, 0.0
        %v246 = vsel %vm245, 1, 0
        %v247 = vcvt.s32.f32 %v246
        %v248 = vadd.f32 %v244, 0.0
        %v249 = vadd.f32 %v247, 0.0
        %v250 = vld [vmem:[%s205] sm:$0xff]
        %v251 = vadd.f32 %v250, %v248
        %252 = vst [vmem:[%s205] sm:$0xff] %v251
        %v253 = vld [vmem:[%s209] sm:$0xff]
        %v254 = vadd.f32 %v253, %v249
        %255 = vst [vmem:[%s209] sm:$0xff] %v254
        %p256 = scmp.lt.s32.totalorder %s20, 1
        %s257 = scalar_select %p256, %s20, 1
        %s258 = smul.addr %s257, 8
        %s259 = scalar_lea.vmem %s2, %s258
        %p260 = scmp.lt.s32.totalorder %s20, 1
        %s261 = scalar_select %p260, %s20, 1
        %s262 = smul.addr %s261, 8
        %s263 = scalar_lea.vmem %s3, %s262
        // Predicated region
        $region37: #{my_loss2.1} parent=27 // pred_check
          %p264 = pneg %p95
        $region38: #{my_loss2.1} parent=27 // pred_check_branch
          %266 = sbr.rel (%p264) target = $region40
        $region39: #{my_loss2.1} parent=27 // pred_region
          _
        $region40: #{my_loss2.1} parent=27 // pred_fallthru
          _
        // Predicated region
        $region41: #{my_loss2.1} parent=27 // pred_check
          %p267 = pneg %p121
        $region42: #{my_loss2.1} parent=27 // pred_check_branch
          %269 = sbr.rel (%p267) target = $region44
        $region43: #{my_loss2.1} parent=27 // pred_region
          _
        $region44: #{my_loss2.1} parent=27 // pred_fallthru
          _
      $region28: #{my_loss2.1} parent=5 // pred_fallthru
        _
      %p270 = scmp.le.s32.totalorder 2, %s11
      // Predicated region
      $region45: #{my_loss2.1} parent=5 // pred_check
        %p271 = pneg %p270
      $region46: #{my_loss2.1} parent=5 // pred_check_branch
        %273 = sbr.rel (%p271) target = $region48
      $region47: #{my_loss2.1} parent=5 // pred_region
        %s274 = ssub.s32 %s11, 2
        // Predicated region
        $region49: #{my_loss2.1} parent=47 // pred_check
          %p275 = pneg %p101
        $region50: #{my_loss2.1} parent=47 // pred_check_branch
          %277 = sbr.rel (%p275) target = $region52
        $region51: #{my_loss2.1} parent=47 // pred_region
          %p278 = scmp.lt.s32.totalorder %s22, 1
          %s279 = scalar_select %p278, %s22, 1
          %s280 = smul.addr %s279, 8
          %s281 = scalar_lea.vmem %s2, %s280
        $region52: #{my_loss2.1} parent=47 // pred_fallthru
          _
        // Predicated region
        $region53: #{my_loss2.1} parent=47 // pred_check
          %p282 = pneg %p127
        $region54: #{my_loss2.1} parent=47 // pred_check_branch
          %284 = sbr.rel (%p282) target = $region56
        $region55: #{my_loss2.1} parent=47 // pred_region
          %p285 = scmp.lt.s32.totalorder %s22, 1
          %s286 = scalar_select %p285, %s22, 1
          %s287 = smul.addr %s286, 8
          %s288 = scalar_lea.vmem %s3, %s287
        $region56: #{my_loss2.1} parent=47 // pred_fallthru
          _
      $region48: #{my_loss2.1} parent=5 // pred_fallthru
        _
    $region6: #{my_loss2.1} parent=1 // loop_footer
      %s15 = sadd.s32 1, %s11
    $region7: #{my_loss2.1} parent=1 // loop_footer_branch
      %10 = sbr.rel target = $region3
    $region8: #{my_loss2.1} parent=1 // loop_exit
      _
    %289 = vsyncpa [#allocation3], 1
    %s290 = scalar_lea.sflag [#allocation3], 1
    %291 = vsyncpa %s290, 1

</llo_original>
